<compile_context>
chip_gen: v5e
topology: v5e:2x2
jax: 0.10.0
libtpu: 0.0.40
codegen_flags: <defaults>
</compile_context>

<pallas_src>
import jax
import jax.numpy as jnp
import numpy as np
from jax.experimental import pallas as pl
from jax.experimental.pallas import tpu as pltpu


# ----------------------------------------------------------------------------
# Fused kernel (one batch-block of NB images per grid step, all 2-D blocks)
#   x_ref      : (NB*OH, 4*OW*cin)    parity-plane-major, lane-flattened input
#   s1/t1_ref  : (1, 4*OW*cin)        BN1 scale/shift tiled across lanes
#   w1_ref     : (4*OW*cin, 4*OW*mid) kron(I_{4OW}, w1 * s2)  (1x1 conv + BN2 scale)
#   t2_ref     : (1, 4*OW*mid)        BN2 shift tiled across lanes
#   macc_ref   : (4*OW*mid, OW*cout)  all kh in {1,2} conv2 taps, col-shift folded in
#   mshift_ref : (2*OW*mid, OW*cout)  kh==0 taps (need the row above), planes 2..3
#   sdown_ref  : (NB*OH, NB*OH)       block-diag per-image row-shift matrix
#   o_ref      : (NB*OH, OW*cout)     lane-dense output block
# ----------------------------------------------------------------------------
def _encoding_block_kernel(x_ref, s1_ref, t1_ref, w1_ref, t2_ref,
                           macc_ref, mshift_ref, sdown_ref, o_ref):
    # Stage 1: BN1 -> ReLU -> 1x1 conv (BN2 scale folded) -> +BN2 shift -> ReLU
    h = jnp.maximum(x_ref[...] * s1_ref[...] + t1_ref[...], 0.0)
    z = jnp.dot(h, w1_ref[...], preferred_element_type=jnp.float32)
    z = jnp.maximum(z + t2_ref[...], 0.0)                     # (R, 4*OW*mid)

    # Stage 2: 3x3 stride-2 pad-1 conv = 2 block matmuls + per-image row shift.
    acc = jnp.dot(z, macc_ref[...], preferred_element_type=jnp.float32)
    soff = w1_ref.shape[1] - mshift_ref.shape[0]              # static: 2*OW*mid
    sacc = jnp.dot(z[:, soff:], mshift_ref[...],
                   preferred_element_type=jnp.float32)
    o_ref[...] = acc + jnp.dot(sdown_ref[...], sacc,
                               preferred_element_type=jnp.float32)


# ----------------------------------------------------------------------------
# EncodingBlock forward (Pallas)
# ----------------------------------------------------------------------------
def encoding_block_forward(x_nchw, params, *, eps=1e-5, images_per_step=None):
    """x_nchw: (N, Cin, H, W) float32  ->  (N, Cout, H//2, W//2) float32."""
    N, cin, H, W = x_nchw.shape
    w1 = params["w1"]                      # (mid, cin, 1, 1)
    w2 = params["w2"]                      # (cout, mid, 3, 3)
    mid, cout = w1.shape[0], w2.shape[0]
    assert H % 2 == 0 and W % 2 == 0
    OH, OW = H // 2, W // 2
    L_in, L_mid, L_out = 4 * OW * cin, 4 * OW * mid, OW * cout

    # Fold BN (inference mode) into per-channel scale/shift; fold s2 into w1.
    s1 = params["g1"] / jnp.sqrt(params["v1"] + eps)
    t1 = params["b1"] - params["m1"] * s1
    s2 = params["g2"] / jnp.sqrt(params["v2"] + eps)
    t2 = params["b2"] - params["m2"] * s2
    w1s = (w1.reshape(mid, cin) * s2[:, None]).T.astype(jnp.float32)   # (cin, mid)

    # Batch blocking: NB images per grid step, batch merged into rows.
    NB = images_per_step if images_per_step is not None else min(N, 32)
    Np = pl.cdiv(N, NB) * NB

    xp = x_nchw.astype(jnp.float32)
    if Np != N:
        xp = jnp.pad(xp, ((0, Np - N), (0, 0), (0, 0), (0, 0)))
    # Single fused layout transform (only XLA transpose of the activation):
    #   x2d[n*OH + i, (2*ph+pw)*OW*cin + j*cin + c] = x[n, c, 2i+ph, 2j+pw]
    xp = (xp.reshape(Np, cin, OH, 2, OW, 2)
            .transpose(0, 2, 3, 5, 4, 1)           # (n, i, ph, pw, j, c)
            .reshape(Np * OH, L_in))

    # Per-channel BN vectors tiled across the flattened lane axis.
    s1_t = jnp.tile(s1, 4 * OW).reshape(1, L_in).astype(jnp.float32)
    t1_t = jnp.tile(t1, 4 * OW).reshape(1, L_in).astype(jnp.float32)
    t2_t = jnp.tile(t2, 4 * OW).reshape(1, L_mid).astype(jnp.float32)

    # 1x1 conv weight, block-diagonal over (plane, ow).
    w1_big = jnp.kron(jnp.eye(4 * OW, dtype=jnp.float32), w1s)        # (L_in, L_mid)

    # 3x3 stride-2 conv: fold all 9 taps into two block matrices.
    # kw==0 reads column ow-1 (left zero pad) -> super-diagonal column selector.
    ident = jnp.eye(OW, dtype=jnp.float32)
    shift = jnp.eye(OW, k=1, dtype=jnp.float32)
    m_acc = jnp.zeros((L_mid, L_out), jnp.float32)            # kh in {1,2}
    m_shift = jnp.zeros((2 * OW * mid, L_out), jnp.float32)   # kh == 0 (planes 2,3)
    for kh in range(3):
        ph = 0 if kh == 1 else 1
        for kw in range(3):
            pw = 0 if kw == 1 else 1
            p = 2 * ph + pw
            sel = shift if kw == 0 else ident
            blk = jnp.kron(sel, w2[:, :, kh, kw].T.astype(jnp.float32))
            if kh == 0:                       # reads the row above -> shift group
                r0 = (p - 2) * OW * mid
                m_shift = m_shift.at[r0:r0 + OW * mid].add(blk)
            else:
                r0 = p * OW * mid
                m_acc = m_acc.at[r0:r0 + OW * mid].add(blk)

    # Per-image row-shift matrix (dest row oh <- source row oh-1), block-diag
    # over the NB images merged into the sublane axis.
    sdown = jnp.kron(jnp.eye(NB, dtype=jnp.float32),
                     jnp.eye(OH, k=-1, dtype=jnp.float32))            # (NB*OH, NB*OH)

    R = NB * OH
    out2d = pl.pallas_call(
        _encoding_block_kernel,
        out_shape=jax.ShapeDtypeStruct((Np * OH, L_out), jnp.float32),
        grid_spec=pltpu.PrefetchScalarGridSpec(
            num_scalar_prefetch=0,
            grid=(Np // NB,),
            in_specs=[
                pl.BlockSpec((R, L_in), lambda n: (n, 0)),
                pl.BlockSpec((1, L_in), lambda n: (0, 0)),
                pl.BlockSpec((1, L_in), lambda n: (0, 0)),
                pl.BlockSpec((L_in, L_mid), lambda n: (0, 0)),
                pl.BlockSpec((1, L_mid), lambda n: (0, 0)),
                pl.BlockSpec((L_mid, L_out), lambda n: (0, 0)),
                pl.BlockSpec((2 * OW * mid, L_out), lambda n: (0, 0)),
                pl.BlockSpec((R, R), lambda n: (0, 0)),
            ],
            out_specs=pl.BlockSpec((R, L_out), lambda n: (n, 0)),
        ),
        compiler_params=pltpu.CompilerParams(
            dimension_semantics=("parallel",),
            vmem_limit_bytes=32 * 1024 * 1024),
    )(xp, s1_t, t1_t, w1_big, t2_t, m_acc, m_shift, sdown)

    # out2d[n*OH + oh, ow*cout + co]  ->  NCHW
    out = out2d.reshape(Np, OH, OW, cout)[:N]
    return jnp.transpose(out, (0, 3, 1, 2))


# ----------------------------------------------------------------------------
# Pure-JAX reference (mirrors the PyTorch forward, inference-mode BN)
# ----------------------------------------------------------------------------
def reference_forward(x, p, *, eps=1e-5):
    def bn(x, g, b, m, v):
        return ((x - m[None, :, None, None]) /
                jnp.sqrt(v[None, :, None, None] + eps)
                * g[None, :, None, None] + b[None, :, None, None])

    h1 = jnp.maximum(bn(x, p["g1"], p["b1"], p["m1"], p["v1"]), 0.0)
    c1 = jax.lax.conv_general_dilated(
        h1, p["w1"], window_strides=(1, 1), padding="VALID",
        dimension_numbers=("NCHW", "OIHW", "NCHW"))
    h2 = jnp.maximum(bn(c1, p["g2"], p["b2"], p["m2"], p["v2"]), 0.0)
    c2 = jax.lax.conv_general_dilated(
        h2, p["w2"], window_strides=(2, 2), padding=((1, 1), (1, 1)),
        dimension_numbers=("NCHW", "OIHW", "NCHW"))
    return c2


if __name__ == "__main__":
    # Small shapes: in_planes=4, mid_planes=8, out_planes=16, 16x16 spatial.
    N, cin, mid, cout, H, W = 2, 4, 8, 16, 16, 16

    key = jax.random.PRNGKey(0)
    keys = jax.random.split(key, 12)
    x = jax.random.normal(keys[0], (N, cin, H, W), jnp.float32)

    params = {
        "w1": jax.random.normal(keys[1], (mid, cin, 1, 1), jnp.float32) * 0.3,
        "w2": jax.random.normal(keys[2], (cout, mid, 3, 3), jnp.float32) * 0.1,
        "g1": jax.random.normal(keys[3], (cin,), jnp.float32) * 0.1 + 1.0,
        "b1": jax.random.normal(keys[4], (cin,), jnp.float32) * 0.1,
        "m1": jax.random.normal(keys[5], (cin,), jnp.float32) * 0.1,
        "v1": jax.random.uniform(keys[6], (cin,), jnp.float32, 0.5, 1.5),
        "g2": jax.random.normal(keys[7], (mid,), jnp.float32) * 0.1 + 1.0,
        "b2": jax.random.normal(keys[8], (mid,), jnp.float32) * 0.1,
        "m2": jax.random.normal(keys[9], (mid,), jnp.float32) * 0.1,
        "v2": jax.random.uniform(keys[10], (mid,), jnp.float32, 0.5, 1.5),
    }

    out = jax.block_until_ready(encoding_block_forward(x, params))
    ref = jax.block_until_ready(reference_forward(x, params))

    assert out.shape == (N, cout, H // 2, W // 2), out.shape
    np.testing.assert_allclose(np.asarray(out), np.asarray(ref),
                               rtol=1e-4, atol=1e-4)
    print("KERNEL_OK")
</pallas_src>

<mosaic_0001>
module attributes {stable_mosaic.version = 11 : i64} {
  func.func @_encoding_block_kernel(%arg0: i32, %arg1: memref<16x128xf32, #tpu.memory_space<vmem>>, %arg2: memref<1x128xf32, #tpu.memory_space<vmem>>, %arg3: memref<1x128xf32, #tpu.memory_space<vmem>>, %arg4: memref<128x256xf32, #tpu.memory_space<vmem>>, %arg5: memref<1x256xf32, #tpu.memory_space<vmem>>, %arg6: memref<256x128xf32, #tpu.memory_space<vmem>>, %arg7: memref<128x128xf32, #tpu.memory_space<vmem>>, %arg8: memref<16x16xf32, #tpu.memory_space<vmem>>, %arg9: memref<16x128xf32, #tpu.memory_space<vmem>>) attributes {dimension_semantics = [#tpu.dimension_semantics<parallel>], iteration_bounds = array<i64: 1>, scalar_prefetch = 0 : i64, scratch_operands = 0 : i64, tpu.core_type = #tpu.core_type<tc>, window_params = [{transform_indices = @transform_0, window_bounds = array<i64: 16, 128>}, {pipeline_mode = #tpu.pipeline_mode<synchronous>, transform_indices = @transform_1, window_bounds = array<i64: 1, 128>}, {pipeline_mode = #tpu.pipeline_mode<synchronous>, transform_indices = @transform_2, window_bounds = array<i64: 1, 128>}, {pipeline_mode = #tpu.pipeline_mode<synchronous>, transform_indices = @transform_3, window_bounds = array<i64: 128, 256>}, {pipeline_mode = #tpu.pipeline_mode<synchronous>, transform_indices = @transform_4, window_bounds = array<i64: 1, 256>}, {pipeline_mode = #tpu.pipeline_mode<synchronous>, transform_indices = @transform_5, window_bounds = array<i64: 256, 128>}, {pipeline_mode = #tpu.pipeline_mode<synchronous>, transform_indices = @transform_6, window_bounds = array<i64: 128, 128>}, {pipeline_mode = #tpu.pipeline_mode<synchronous>, transform_indices = @transform_7, window_bounds = array<i64: 16, 16>}, {transform_indices = @transform_8, window_bounds = array<i64: 16, 128>}]} {
    %c0 = arith.constant 0 : index
    %c0_0 = arith.constant 0 : index
    %0 = vector.load %arg1[%c0, %c0_0] : memref<16x128xf32, #tpu.memory_space<vmem>>, vector<16x128xf32>
    %c0_1 = arith.constant 0 : index
    %c0_2 = arith.constant 0 : index
    %1 = vector.load %arg2[%c0_1, %c0_2] : memref<1x128xf32, #tpu.memory_space<vmem>>, vector<1x128xf32>
    %2 = vector.broadcast %1 : vector<1x128xf32> to vector<16x128xf32>
    %3 = arith.mulf %0, %2 : vector<16x128xf32>
    %c0_3 = arith.constant 0 : index
    %c0_4 = arith.constant 0 : index
    %4 = vector.load %arg3[%c0_3, %c0_4] : memref<1x128xf32, #tpu.memory_space<vmem>>, vector<1x128xf32>
    %5 = vector.broadcast %4 : vector<1x128xf32> to vector<16x128xf32>
    %6 = arith.addf %3, %5 : vector<16x128xf32>
    %cst = arith.constant 0.000000e+00 : f32
    %7 = vector.broadcast %cst : f32 to vector<16x128xf32>
    %8 = arith.maximumf %6, %7 : vector<16x128xf32>
    %c0_5 = arith.constant 0 : index
    %c0_6 = arith.constant 0 : index
    %9 = vector.load %arg4[%c0_5, %c0_6] : memref<128x256xf32, #tpu.memory_space<vmem>>, vector<128x256xf32>
    %cst_7 = arith.constant dense<0.000000e+00> : vector<16x256xf32>
    %10 = tpu.matmul %8, %9, %cst_7 {dimension_numbers = #tpu.dot_dimension_numbers<[1], [0], [0], [1], [0, 0, 1, 1], [], []>} : vector<16x128xf32>, vector<128x256xf32>, vector<16x256xf32> -> vector<16x256xf32>
    %c0_8 = arith.constant 0 : index
    %c0_9 = arith.constant 0 : index
    %11 = vector.load %arg5[%c0_8, %c0_9] : memref<1x256xf32, #tpu.memory_space<vmem>>, vector<1x256xf32>
    %12 = vector.broadcast %11 : vector<1x256xf32> to vector<16x256xf32>
    %13 = arith.addf %10, %12 : vector<16x256xf32>
    %cst_10 = arith.constant 0.000000e+00 : f32
    %14 = vector.broadcast %cst_10 : f32 to vector<16x256xf32>
    %15 = arith.maximumf %13, %14 : vector<16x256xf32>
    %c0_11 = arith.constant 0 : index
    %c0_12 = arith.constant 0 : index
    %16 = vector.load %arg6[%c0_11, %c0_12] : memref<256x128xf32, #tpu.memory_space<vmem>>, vector<256x128xf32>
    %cst_13 = arith.constant dense<0.000000e+00> : vector<16x128xf32>
    %17 = tpu.matmul %15, %16, %cst_13 {dimension_numbers = #tpu.dot_dimension_numbers<[1], [0], [0], [1], [0, 0, 1, 1], [], []>} : vector<16x256xf32>, vector<256x128xf32>, vector<16x128xf32> -> vector<16x128xf32>
    %18 = vector.extract_strided_slice %15 {offsets = [0, 128], sizes = [16, 128], strides = [1, 1]} : vector<16x256xf32> to vector<16x128xf32>
    %c0_14 = arith.constant 0 : index
    %c0_15 = arith.constant 0 : index
    %19 = vector.load %arg7[%c0_14, %c0_15] : memref<128x128xf32, #tpu.memory_space<vmem>>, vector<128x128xf32>
    %cst_16 = arith.constant dense<0.000000e+00> : vector<16x128xf32>
    %20 = tpu.matmul %18, %19, %cst_16 {dimension_numbers = #tpu.dot_dimension_numbers<[1], [0], [0], [1], [0, 0, 1, 1], [], []>} : vector<16x128xf32>, vector<128x128xf32>, vector<16x128xf32> -> vector<16x128xf32>
    %c0_17 = arith.constant 0 : index
    %c0_18 = arith.constant 0 : index
    %21 = vector.load %arg8[%c0_17, %c0_18] : memref<16x16xf32, #tpu.memory_space<vmem>>, vector<16x16xf32>
    %cst_19 = arith.constant dense<0.000000e+00> : vector<16x128xf32>
    %22 = tpu.matmul %21, %20, %cst_19 {dimension_numbers = #tpu.dot_dimension_numbers<[1], [0], [0], [1], [0, 0, 1, 1], [], []>} : vector<16x16xf32>, vector<16x128xf32>, vector<16x128xf32> -> vector<16x128xf32>
    %23 = arith.addf %17, %22 : vector<16x128xf32>
    %c0_20 = arith.constant 0 : index
    %c0_21 = arith.constant 0 : index
    %24 = vector.load %arg9[%c0_20, %c0_21] : memref<16x128xf32, #tpu.memory_space<vmem>>, vector<16x128xf32>
    tpu.vector_store %arg9[%c0_20, %c0_21], %23 {strides = array<i32>} : memref<16x128xf32, #tpu.memory_space<vmem>>, vector<16x128xf32>,
    return
  }
  func.func @transform_0(%arg0: i32) -> (i32, i32) {
    %c0_i32 = arith.constant 0 : i32
    %c0_i32_0 = arith.constant 0 : i32
    return %arg0, %c0_i32 : i32, i32
  }
  func.func @transform_1(%arg0: i32) -> (i32, i32) {
    %c0_i32 = arith.constant 0 : i32
    %c0_i32_0 = arith.constant 0 : i32
    %c0_i32_1 = arith.constant 0 : i32
    return %c0_i32, %c0_i32_0 : i32, i32
  }
  func.func @transform_2(%arg0: i32) -> (i32, i32) {
    %c0_i32 = arith.constant 0 : i32
    %c0_i32_0 = arith.constant 0 : i32
    %c0_i32_1 = arith.constant 0 : i32
    return %c0_i32, %c0_i32_0 : i32, i32
  }
  func.func @transform_3(%arg0: i32) -> (i32, i32) {
    %c0_i32 = arith.constant 0 : i32
    %c0_i32_0 = arith.constant 0 : i32
    %c0_i32_1 = arith.constant 0 : i32
    return %c0_i32, %c0_i32_0 : i32, i32
  }
  func.func @transform_4(%arg0: i32) -> (i32, i32) {
    %c0_i32 = arith.constant 0 : i32
    %c0_i32_0 = arith.constant 0 : i32
    %c0_i32_1 = arith.constant 0 : i32
    return %c0_i32, %c0_i32_0 : i32, i32
  }
  func.func @transform_5(%arg0: i32) -> (i32, i32) {
    %c0_i32 = arith.constant 0 : i32
    %c0_i32_0 = arith.constant 0 : i32
    %c0_i32_1 = arith.constant 0 : i32
    return %c0_i32, %c0_i32_0 : i32, i32
  }
  func.func @transform_6(%arg0: i32) -> (i32, i32) {
    %c0_i32 = arith.constant 0 : i32
    %c0_i32_0 = arith.constant 0 : i32
    %c0_i32_1 = arith.constant 0 : i32
    return %c0_i32, %c0_i32_0 : i32, i32
  }
  func.func @transform_7(%arg0: i32) -> (i32, i32) {
    %c0_i32 = arith.constant 0 : i32
    %c0_i32_0 = arith.constant 0 : i32
    %c0_i32_1 = arith.constant 0 : i32
    return %c0_i32, %c0_i32_0 : i32, i32
  }
  func.func @transform_8(%arg0: i32) -> (i32, i32) {
    %c0_i32 = arith.constant 0 : i32
    %c0_i32_0 = arith.constant 0 : i32
    return %arg0, %c0_i32 : i32, i32
  }
}

</mosaic_0001>

<llo_original>
// kernel: tpu_custom_call.1
$region0: #{tpu_custom_call.1}
  #allocation0 [shape = 'u32[]', space=smem, size = 0x4, offset = 0x4, fixed_abs, tag = 'smem constant byte address 0x4 - core index']
  #allocation1 [shape = 'u32[72,128]{1,0:T(1,128)}', space=vmem, size = 0x9000, scoped, tag = 'internal scratch']
  %s0 = inlined_call_operand.hbm [shape: f32[16,128], index: 0, kind: input, shape index: {}]
  %s1 = inlined_call_operand.hbm [shape: f32[1,128], index: 1, kind: input, shape index: {}]
  %s2 = inlined_call_operand.vmem [shape: f32[1,128], index: 2, kind: input, shape index: {}]
  %s3 = inlined_call_operand.hbm [shape: f32[128,256], index: 3, kind: input, shape index: {}]
  %s4 = inlined_call_operand.vmem [shape: f32[1,256], index: 4, kind: input, shape index: {}]
  %s5 = inlined_call_operand.hbm [shape: f32[256,128], index: 5, kind: input, shape index: {}]
  %s6 = inlined_call_operand.hbm [shape: f32[128,128], index: 6, kind: input, shape index: {}]
  %s7 = inlined_call_operand.hbm [shape: f32[16,16], index: 7, kind: input, shape index: {}]
  %s8 = inlined_call_operand.hbm [shape: f32[16,128], index: 8, kind: output, shape index: {}]
  %s9 = sld [smem:[#allocation0]]
  $region66: #{tpu_custom_call.1} parent=0
    _
  %s11 = ssub.s32 1, %s9
  %s12 = scalar_select 0, %s11, %s9
  $region1: #{tpu_custom_call.1} parent=0
    #allocation2 [shape = 'u8[8192]{0}', space=vmem, size = 0x2000, scoped, tag = 'input window, operand 0, single buffered']
    #allocation3 [shape = 's32[1]{0}', space=sflag, size = 0x4, scoped, tag = 'scoped memory for tpu_custom_call.1']
    #allocation4 [shape = 's32[1]{0}', space=sflag, size = 0x4, scoped, tag = 'scoped memory for tpu_custom_call.1']
    #allocation5 [shape = 'u8[512]{0}', space=vmem, size = 0x400, scoped, tag = 'input window, operand 1, single buffered']
    #allocation6 [shape = 's32[1]{0}', space=sflag, size = 0x4, scoped, tag = 'scoped memory for tpu_custom_call.1']
    #allocation7 [shape = 'u8[131072]{0}', space=vmem, size = 0x20000, scoped, tag = 'input window, operand 3, single buffered']
    #allocation8 [shape = 'u8[131072]{0}', space=vmem, size = 0x20000, scoped, tag = 'input window, operand 5, single buffered']
    #allocation9 [shape = 's32[1]{0}', space=sflag, size = 0x4, scoped, tag = 'scoped memory for tpu_custom_call.1']
    #allocation10 [shape = 'u8[65536]{0}', space=vmem, size = 0x10000, scoped, tag = 'input window, operand 6, single buffered']
    #allocation11 [shape = 'u8[8192]{0}', space=vmem, size = 0x2000, scoped, tag = 'input window, operand 7, single buffered']
    #allocation12 [shape = 's32[1]{0}', space=sflag, size = 0x4, scoped, tag = 'scoped memory for tpu_custom_call.1']
    #allocation13 [shape = 'u8[8192]{0}', space=vmem, size = 0x2000, scoped, tag = 'output window, operand 0, single buffered']
    %13 = vsyncpa [#allocation3], 0
    %14 = vsyncpa [#allocation6], 0
    %15 = vsyncpa [#allocation9], 0
    %16 = vsyncpa [#allocation12], 0
    %17 = vsyncpa [#allocation4], 0
    // Predicated region
    $region2: #{tpu_custom_call.1} parent=1 // pred_check
      _
    $region3: #{tpu_custom_call.1} parent=1 // pred_check_branch
      %19 = sbr.rel (0) target = $region5
    $region4: #{tpu_custom_call.1} parent=1 // pred_region
      %21 = vsyncadd [#allocation3], 0
      %s22 = sshll.u32 %s0, 4
      %s23 = int_to_ptr.hbm [resolvable:$true] %s22
      %s24 = sshll.u32 [#allocation2], 4
      %s25 = int_to_ptr.vmem [resolvable:$true] %s24
      %30 = dma.hbm_to_vmem [thread:$0]  %s23, 256, %s25, [#allocation3], 128, 128, 8
    $region5: #{tpu_custom_call.1} parent=1 // pred_fallthru
      _
    // Predicated region
    $region6: #{tpu_custom_call.1} parent=1 // pred_check
      _
    $region7: #{tpu_custom_call.1} parent=1 // pred_check_branch
      %32 = sbr.rel (0) target = $region9
    $region8: #{tpu_custom_call.1} parent=1 // pred_region
      %34 = vsyncadd [#allocation6], 0
      %s36 = sshll.u32 %s1, 4
      %s37 = int_to_ptr.hbm [resolvable:$true] %s36
      %s38 = sshll.u32 [#allocation5], 4
      %s39 = int_to_ptr.vmem [resolvable:$true] %s38
      %41 = dma.hbm_to_vmem [thread:$0]  %s37, 16, %s39, [#allocation6]
    $region9: #{tpu_custom_call.1} parent=1 // pred_fallthru
      _
    // Predicated region
    $region10: #{tpu_custom_call.1} parent=1 // pred_check
      _
    $region11: #{tpu_custom_call.1} parent=1 // pred_check_branch
      %43 = sbr.rel (0) target = $region13
    $region12: #{tpu_custom_call.1} parent=1 // pred_region
      _
    $region13: #{tpu_custom_call.1} parent=1 // pred_fallthru
      _
    // Predicated region
    $region14: #{tpu_custom_call.1} parent=1 // pred_check
      _
    $region15: #{tpu_custom_call.1} parent=1 // pred_check_branch
      %45 = sbr.rel (0) target = $region17
    $region16: #{tpu_custom_call.1} parent=1 // pred_region
      %47 = vsyncadd [#allocation6], 0
      %s48 = sshll.u32 %s3, 4
      %s49 = int_to_ptr.hbm [resolvable:$true] %s48
      %s50 = sshll.u32 [#allocation7], 4
      %s51 = int_to_ptr.vmem [resolvable:$true] %s50
      %56 = dma.hbm_to_vmem [thread:$0]  %s49, 4096, %s51, [#allocation6], 256, 256, 16
    $region17: #{tpu_custom_call.1} parent=1 // pred_fallthru
      _
    // Predicated region
    $region18: #{tpu_custom_call.1} parent=1 // pred_check
      _
    $region19: #{tpu_custom_call.1} parent=1 // pred_check_branch
      %58 = sbr.rel (0) target = $region21
    $region20: #{tpu_custom_call.1} parent=1 // pred_region
      _
    $region21: #{tpu_custom_call.1} parent=1 // pred_fallthru
      _
    // Predicated region
    $region22: #{tpu_custom_call.1} parent=1 // pred_check
      _
    $region23: #{tpu_custom_call.1} parent=1 // pred_check_branch
      %60 = sbr.rel (0) target = $region25
    $region24: #{tpu_custom_call.1} parent=1 // pred_region
      %62 = vsyncadd [#allocation9], 0
      %s63 = sshll.u32 %s5, 4
      %s64 = int_to_ptr.hbm [resolvable:$true] %s63
      %s65 = sshll.u32 [#allocation8], 4
      %s66 = int_to_ptr.vmem [resolvable:$true] %s65
      %71 = dma.hbm_to_vmem [thread:$0]  %s64, 4096, %s66, [#allocation9], 128, 128, 8
    $region25: #{tpu_custom_call.1} parent=1 // pred_fallthru
      _
    // Predicated region
    $region26: #{tpu_custom_call.1} parent=1 // pred_check
      _
    $region27: #{tpu_custom_call.1} parent=1 // pred_check_branch
      %73 = sbr.rel (0) target = $region29
    $region28: #{tpu_custom_call.1} parent=1 // pred_region
      %75 = vsyncadd [#allocation9], 0
      %s76 = sshll.u32 %s6, 4
      %s77 = int_to_ptr.hbm [resolvable:$true] %s76
      %s78 = sshll.u32 [#allocation10], 4
      %s79 = int_to_ptr.vmem [resolvable:$true] %s78
      %84 = dma.hbm_to_vmem [thread:$0]  %s77, 2048, %s79, [#allocation9], 128, 128, 8
    $region29: #{tpu_custom_call.1} parent=1 // pred_fallthru
      _
    // Predicated region
    $region30: #{tpu_custom_call.1} parent=1 // pred_check
      _
    $region31: #{tpu_custom_call.1} parent=1 // pred_check_branch
      %86 = sbr.rel (0) target = $region33
    $region32: #{tpu_custom_call.1} parent=1 // pred_region
      %88 = vsyncadd [#allocation12], 0
      %s89 = sshll.u32 %s7, 4
      %s90 = int_to_ptr.hbm [resolvable:$true] %s89
      %s91 = sshll.u32 [#allocation11], 4
      %s92 = int_to_ptr.vmem [resolvable:$true] %s91
      %97 = dma.hbm_to_vmem [thread:$0]  %s90, 256, %s92, [#allocation12], 128, 128, 8
    $region33: #{tpu_custom_call.1} parent=1 // pred_fallthru
      _
    // Predicated region
    $region34: #{tpu_custom_call.1} parent=1 // pred_check
      _
    $region35: #{tpu_custom_call.1} parent=1 // pred_check_branch
      %99 = sbr.rel (0) target = $region37
    $region36: #{tpu_custom_call.1} parent=1 // pred_region
      %101 = dma.done [#allocation3], 256
    $region37: #{tpu_custom_call.1} parent=1 // pred_fallthru
      _
    // Predicated region
    $region38: #{tpu_custom_call.1} parent=1 // pred_check
      _
    $region39: #{tpu_custom_call.1} parent=1 // pred_check_branch
      %103 = sbr.rel (0) target = $region41
    $region40: #{tpu_custom_call.1} parent=1 // pred_region
      %105 = dma.done [#allocation6], 16
    $region41: #{tpu_custom_call.1} parent=1 // pred_fallthru
      _
    // Predicated region
    $region42: #{tpu_custom_call.1} parent=1 // pred_check
      _
    $region43: #{tpu_custom_call.1} parent=1 // pred_check_branch
      %107 = sbr.rel (0) target = $region45
    $region44: #{tpu_custom_call.1} parent=1 // pred_region
      %109 = dma.done [#allocation6], 4096
    $region45: #{tpu_custom_call.1} parent=1 // pred_fallthru
      _
    // Predicated region
    $region46: #{tpu_custom_call.1} parent=1 // pred_check
      _
    $region47: #{tpu_custom_call.1} parent=1 // pred_check_branch
      %111 = sbr.rel (0) target = $region49
    $region48: #{tpu_custom_call.1} parent=1 // pred_region
      %113 = dma.done [#allocation9], 4096
    $region49: #{tpu_custom_call.1} parent=1 // pred_fallthru
      _
    // Predicated region
    $region50: #{tpu_custom_call.1} parent=1 // pred_check
      _
    $region51: #{tpu_custom_call.1} parent=1 // pred_check_branch
      %115 = sbr.rel (0) target = $region53
    $region52: #{tpu_custom_call.1} parent=1 // pred_region
      %117 = dma.done [#allocation9], 2048
    $region53: #{tpu_custom_call.1} parent=1 // pred_fallthru
      _
    // Predicated region
    $region54: #{tpu_custom_call.1} parent=1 // pred_check
      _
    $region55: #{tpu_custom_call.1} parent=1 // pred_check_branch
      %119 = sbr.rel (0) target = $region57
    $region56: #{tpu_custom_call.1} parent=1 // pred_region
      %121 = dma.done [#allocation12], 256
    $region57: #{tpu_custom_call.1} parent=1 // pred_fallthru
      _
    %v122 = vld [vmem:[#allocation2] sm:$0xff]
    %v123 = vld [vmem:[#allocation2 + $0x8] sm:$0xff]
    %v124 = vld [vmem:[#allocation5] sm:$0x1]
    %v126 = vperm.slane %v124, 0
    %v128 = vmul.f32 %v122, %v126
    %v129 = vmul.f32 %v123, %v126
    %v130 = vld [vmem:[%s2] sm:$0x1]
    %v132 = vperm.slane %v130, 0
    %v134 = vadd.f32 %v128, %v132
    %v135 = vadd.f32 %v129, %v132
    %v136 = vmax.f32 %v134, 0.0
    %v137 = vmax.f32 %v135, 0.0
    %v138 = vld [vmem:[#allocation7] sm:$0xff]
    %v139 = vld [vmem:[#allocation7 + $0x8] sm:$0xff]
    %v140 = vld [vmem:[#allocation7 + $0x10] sm:$0xff]
    %v141 = vld [vmem:[#allocation7 + $0x18] sm:$0xff]
    %v142 = vld [vmem:[#allocation7 + $0x20] sm:$0xff]
    %v143 = vld [vmem:[#allocation7 + $0x28] sm:$0xff]
    %v144 = vld [vmem:[#allocation7 + $0x30] sm:$0xff]
    %v145 = vld [vmem:[#allocation7 + $0x38] sm:$0xff]
    %v146 = vld [vmem:[#allocation7 + $0x40] sm:$0xff]
    %v147 = vld [vmem:[#allocation7 + $0x48] sm:$0xff]
    %v148 = vld [vmem:[#allocation7 + $0x50] sm:$0xff]
    %v149 = vld [vmem:[#allocation7 + $0x58] sm:$0xff]
    %v150 = vld [vmem:[#allocation7 + $0x60] sm:$0xff]
    %v151 = vld [vmem:[#allocation7 + $0x68] sm:$0xff]
    %v152 = vld [vmem:[#allocation7 + $0x70] sm:$0xff]
    %v153 = vld [vmem:[#allocation7 + $0x78] sm:$0xff]
    %v154 = vld [vmem:[#allocation7 + $0x80] sm:$0xff]
    %v155 = vld [vmem:[#allocation7 + $0x88] sm:$0xff]
    %v156 = vld [vmem:[#allocation7 + $0x90] sm:$0xff]
    %v157 = vld [vmem:[#allocation7 + $0x98] sm:$0xff]
    %v158 = vld [vmem:[#allocation7 + $0xa0] sm:$0xff]
    %v159 = vld [vmem:[#allocation7 + $0xa8] sm:$0xff]
    %v160 = vld [vmem:[#allocation7 + $0xb0] sm:$0xff]
    %v161 = vld [vmem:[#allocation7 + $0xb8] sm:$0xff]
    %v162 = vld [vmem:[#allocation7 + $0xc0] sm:$0xff]
    %v163 = vld [vmem:[#allocation7 + $0xc8] sm:$0xff]
    %v164 = vld [vmem:[#allocation7 + $0xd0] sm:$0xff]
    %v165 = vld [vmem:[#allocation7 + $0xd8] sm:$0xff]
    %v166 = vld [vmem:[#allocation7 + $0xe0] sm:$0xff]
    %v167 = vld [vmem:[#allocation7 + $0xe8] sm:$0xff]
    %v168 = vld [vmem:[#allocation7 + $0xf0] sm:$0xff]
    %v169 = vld [vmem:[#allocation7 + $0xf8] sm:$0xff]
    %v170 = vld [vmem:[%s4] sm:$0x3]
    %v172 = vperm.slane %v170, 0
    %v173 = vperm.slane %v170, 1
    %176 = vmatpush.msra.mxu0 %v168
    %177 = vmatpush.msra.mxu0 %v166
    %178 = vmatpush.msra.mxu0 %v164
    %179 = vmatpush.msra.mxu0 %v162
    %180 = vmatpush.msra.mxu0 %v160
    %181 = vmatpush.msra.mxu0 %v158
    %182 = vmatpush.msra.mxu0 %v156
    %183 = vmatpush.msra.mxu0 %v154
    %184 = vmatpush.msra.mxu0 %v152
    %185 = vmatpush.msra.mxu0 %v150
    %186 = vmatpush.msra.mxu0 %v148
    %187 = vmatpush.msra.mxu0 %v146
    %188 = vmatpush.msra.mxu0 %v144
    %189 = vmatpush.msra.mxu0 %v142
    %190 = vmatpush.msra.mxu0 %v140
    %191 = vmatpush.msra.mxu0 %v138
    %192 = vmatmul.f32.gmra.mxu0 %v136
    %v193 = vpop.f32.mrf.mxu0
    %v194 = vadd.f32 %v172, %v193
    %195 = vmatmul.f32.gmra.mxu0 %v137
    %v196 = vpop.f32.mrf.mxu0
    %v197 = vadd.f32 %v172, %v196
    %198 = vdwg.mxu0
    %199 = vmatpush.msra.mxu0 %v169
    %200 = vmatpush.msra.mxu0 %v167
    %201 = vmatpush.msra.mxu0 %v165
    %202 = vmatpush.msra.mxu0 %v163
    %203 = vmatpush.msra.mxu0 %v161
    %204 = vmatpush.msra.mxu0 %v159
    %205 = vmatpush.msra.mxu0 %v157
    %206 = vmatpush.msra.mxu0 %v155
    %207 = vmatpush.msra.mxu0 %v153
    %208 = vmatpush.msra.mxu0 %v151
    %209 = vmatpush.msra.mxu0 %v149
    %210 = vmatpush.msra.mxu0 %v147
    %211 = vmatpush.msra.mxu0 %v145
    %212 = vmatpush.msra.mxu0 %v143
    %213 = vmatpush.msra.mxu0 %v141
    %214 = vmatpush.msra.mxu0 %v139
    %215 = vmatmul.f32.gmra.mxu0 %v136
    %v216 = vpop.f32.mrf.mxu0
    %v217 = vadd.f32 %v173, %v216
    %218 = vmatmul.f32.gmra.mxu0 %v137
    %v219 = vpop.f32.mrf.mxu0
    %v220 = vadd.f32 %v173, %v219
    %221 = vdwg.mxu0
    %v222 = vmax.f32 %v194, 0.0
    %v223 = vmax.f32 %v217, 0.0
    %v224 = vmax.f32 %v197, 0.0
    %v225 = vmax.f32 %v220, 0.0
    %v226 = vld [vmem:[#allocation8] sm:$0xff]
    %v227 = vld [vmem:[#allocation8 + $0x8] sm:$0xff]
    %v228 = vld [vmem:[#allocation8 + $0x10] sm:$0xff]
    %v229 = vld [vmem:[#allocation8 + $0x18] sm:$0xff]
    %v230 = vld [vmem:[#allocation8 + $0x20] sm:$0xff]
    %v231 = vld [vmem:[#allocation8 + $0x28] sm:$0xff]
    %v232 = vld [vmem:[#allocation8 + $0x30] sm:$0xff]
    %v233 = vld [vmem:[#allocation8 + $0x38] sm:$0xff]
    %v234 = vld [vmem:[#allocation8 + $0x40] sm:$0xff]
    %v235 = vld [vmem:[#allocation8 + $0x48] sm:$0xff]
    %v236 = vld [vmem:[#allocation8 + $0x50] sm:$0xff]
    %v237 = vld [vmem:[#allocation8 + $0x58] sm:$0xff]
    %v238 = vld [vmem:[#allocation8 + $0x60] sm:$0xff]
    %v239 = vld [vmem:[#allocation8 + $0x68] sm:$0xff]
    %v240 = vld [vmem:[#allocation8 + $0x70] sm:$0xff]
    %v241 = vld [vmem:[#allocation8 + $0x78] sm:$0xff]
    %v242 = vld [vmem:[#allocation8 + $0x80] sm:$0xff]
    %v243 = vld [vmem:[#allocation8 + $0x88] sm:$0xff]
    %v244 = vld [vmem:[#allocation8 + $0x90] sm:$0xff]
    %v245 = vld [vmem:[#allocation8 + $0x98] sm:$0xff]
    %v246 = vld [vmem:[#allocation8 + $0xa0] sm:$0xff]
    %v247 = vld [vmem:[#allocation8 + $0xa8] sm:$0xff]
    %v248 = vld [vmem:[#allocation8 + $0xb0] sm:$0xff]
    %v249 = vld [vmem:[#allocation8 + $0xb8] sm:$0xff]
    %v250 = vld [vmem:[#allocation8 + $0xc0] sm:$0xff]
    %v251 = vld [vmem:[#allocation8 + $0xc8] sm:$0xff]
    %v252 = vld [vmem:[#allocation8 + $0xd0] sm:$0xff]
    %v253 = vld [vmem:[#allocation8 + $0xd8] sm:$0xff]
    %v254 = vld [vmem:[#allocation8 + $0xe0] sm:$0xff]
    %v255 = vld [vmem:[#allocation8 + $0xe8] sm:$0xff]
    %v256 = vld [vmem:[#allocation8 + $0xf0] sm:$0xff]
    %v257 = vld [vmem:[#allocation8 + $0xf8] sm:$0xff]
    %v258 = vld [vmem:[#allocation10] sm:$0xff]
    %v259 = vld [vmem:[#allocation10 + $0x8] sm:$0xff]
    %v260 = vld [vmem:[#allocation10 + $0x10] sm:$0xff]
    %v261 = vld [vmem:[#allocation10 + $0x18] sm:$0xff]
    %v262 = vld [vmem:[#allocation10 + $0x20] sm:$0xff]
    %v263 = vld [vmem:[#allocation10 + $0x28] sm:$0xff]
    %v264 = vld [vmem:[#allocation10 + $0x30] sm:$0xff]
    %v265 = vld [vmem:[#allocation10 + $0x38] sm:$0xff]
    %v266 = vld [vmem:[#allocation10 + $0x40] sm:$0xff]
    %v267 = vld [vmem:[#allocation10 + $0x48] sm:$0xff]
    %v268 = vld [vmem:[#allocation10 + $0x50] sm:$0xff]
    %v269 = vld [vmem:[#allocation10 + $0x58] sm:$0xff]
    %v270 = vld [vmem:[#allocation10 + $0x60] sm:$0xff]
    %v271 = vld [vmem:[#allocation10 + $0x68] sm:$0xff]
    %v272 = vld [vmem:[#allocation10 + $0x70] sm:$0xff]
    %v273 = vld [vmem:[#allocation10 + $0x78] sm:$0xff]
    %274 = vmatpush.msra.mxu0 %v273
    %275 = vmatpush.msra.mxu0 %v272
    %276 = vmatpush.msra.mxu0 %v271
    %277 = vmatpush.msra.mxu0 %v270
    %278 = vmatpush.msra.mxu0 %v269
    %279 = vmatpush.msra.mxu0 %v268
    %280 = vmatpush.msra.mxu0 %v267
    %281 = vmatpush.msra.mxu0 %v266
    %282 = vmatpush.msra.mxu0 %v265
    %283 = vmatpush.msra.mxu0 %v264
    %284 = vmatpush.msra.mxu0 %v263
    %285 = vmatpush.msra.mxu0 %v262
    %286 = vmatpush.msra.mxu0 %v261
    %287 = vmatpush.msra.mxu0 %v260
    %288 = vmatpush.msra.mxu0 %v259
    %289 = vmatpush.msra.mxu0 %v258
    %290 = vmatmul.f32.gmra.mxu0 %v223
    %v291 = vpop.f32.mrf.mxu0
    %v292 = vadd.f32 0.0, %v291
    %293 = vmatmul.f32.gmra.mxu0 %v225
    %v294 = vpop.f32.mrf.mxu0
    %v295 = vadd.f32 0.0, %v294
    %296 = vdwg.mxu0
    %v297 = vld [vmem:[#allocation11] sm:$0xff]
    %v298 = vld [vmem:[#allocation11 + $0x8] sm:$0xff]
    %vm299 = vcmask 130048
    %v301 = vsel %vm299, %v297, 0
    %v304 = vsel %vm299, %v298, 0
    %306 = vmatpush.msra.mxu0 0.0
    %307 = vmatpush.msra.mxu0 0.0
    %308 = vmatpush.msra.mxu0 0.0
    %309 = vmatpush.msra.mxu0 0.0
    %310 = vmatpush.msra.mxu0 0.0
    %311 = vmatpush.msra.mxu0 0.0
    %312 = vmatpush.msra.mxu0 0.0
    %313 = vmatpush.msra.mxu0 0.0
    %314 = vmatpush.msra.mxu0 0.0
    %315 = vmatpush.msra.mxu0 0.0
    %316 = vmatpush.msra.mxu0 0.0
    %317 = vmatpush.msra.mxu0 0.0
    %318 = vmatpush.msra.mxu0 0.0
    %319 = vmatpush.msra.mxu0 0.0
    %320 = vmatpush.msra.mxu0 %v295
    %321 = vmatpush.msra.mxu0 %v292
    %322 = vmatmul.f32.gmra.mxu0 %v301
    %v323 = vpop.f32.mrf.mxu0
    %v324 = vadd.f32 0.0, %v323
    %325 = vmatmul.f32.gmra.mxu0 %v304
    %v326 = vpop.f32.mrf.mxu0
    %v327 = vadd.f32 0.0, %v326
    %328 = vdwg.mxu0
    %329 = vmatpush.msra.mxu0 %v241
    %330 = vmatpush.msra.mxu0 %v240
    %331 = vmatpush.msra.mxu0 %v239
    %332 = vmatpush.msra.mxu0 %v238
    %333 = vmatpush.msra.mxu0 %v237
    %334 = vmatpush.msra.mxu0 %v236
    %335 = vmatpush.msra.mxu0 %v235
    %336 = vmatpush.msra.mxu0 %v234
    %337 = vmatpush.msra.mxu0 %v233
    %338 = vmatpush.msra.mxu0 %v232
    %339 = vmatpush.msra.mxu0 %v231
    %340 = vmatpush.msra.mxu0 %v230
    %341 = vmatpush.msra.mxu0 %v229
    %342 = vmatpush.msra.mxu0 %v228
    %343 = vmatpush.msra.mxu0 %v227
    %344 = vmatpush.msra.mxu0 %v226
    %345 = vmatmul.f32.gmra.mxu0 %v222
    %v346 = vpop.f32.mrf.mxu0
    %v347 = vadd.f32 %v324, %v346
    %348 = vmatmul.f32.gmra.mxu0 %v224
    %v349 = vpop.f32.mrf.mxu0
    %v350 = vadd.f32 %v327, %v349
    %351 = vdwg.mxu0
    %352 = vmatpush.msra.mxu0 %v257
    %353 = vmatpush.msra.mxu0 %v256
    %354 = vmatpush.msra.mxu0 %v255
    %355 = vmatpush.msra.mxu0 %v254
    %356 = vmatpush.msra.mxu0 %v253
    %357 = vmatpush.msra.mxu0 %v252
    %358 = vmatpush.msra.mxu0 %v251
    %359 = vmatpush.msra.mxu0 %v250
    %360 = vmatpush.msra.mxu0 %v249
    %361 = vmatpush.msra.mxu0 %v248
    %362 = vmatpush.msra.mxu0 %v247
    %363 = vmatpush.msra.mxu0 %v246
    %364 = vmatpush.msra.mxu0 %v245
    %365 = vmatpush.msra.mxu0 %v244
    %366 = vmatpush.msra.mxu0 %v243
    %367 = vmatpush.msra.mxu0 %v242
    %368 = vmatmul.f32.gmra.mxu0 %v223
    %v369 = vpop.f32.mrf.mxu0
    %v370 = vadd.f32 %v347, %v369
    %371 = vmatmul.f32.gmra.mxu0 %v225
    %v372 = vpop.f32.mrf.mxu0
    %v373 = vadd.f32 %v350, %v372
    %374 = vdwg.mxu0
    %375 = vst [vmem:[#allocation13] sm:$0xff] %v370
    %376 = vst [vmem:[#allocation13 + $0x8] sm:$0xff] %v373
    // Predicated region
    $region58: #{tpu_custom_call.1} parent=1 // pred_check
      _
    $region59: #{tpu_custom_call.1} parent=1 // pred_check_branch
      %378 = sbr.rel (0) target = $region61
    $region60: #{tpu_custom_call.1} parent=1 // pred_region
      %380 = vsyncadd [#allocation4], 0
      %s381 = sshll.u32 [#allocation13], 4
      %s382 = int_to_ptr.vmem [resolvable:$true] %s381
      %s383 = sshll.u32 %s8, 4
      %s384 = int_to_ptr.hbm [resolvable:$true] %s383
      %389 = dma.vmem_to_hbm [thread:$0]  %s382, 256, %s384, [#allocation4], 128, 128, 8
    $region61: #{tpu_custom_call.1} parent=1 // pred_fallthru
      _
    // Predicated region
    $region62: #{tpu_custom_call.1} parent=1 // pred_check
      _
    $region63: #{tpu_custom_call.1} parent=1 // pred_check_branch
      %391 = sbr.rel (0) target = $region65
    $region64: #{tpu_custom_call.1} parent=1 // pred_region
      %393 = dma.done [#allocation4], 256
    $region65: #{tpu_custom_call.1} parent=1 // pred_fallthru
      _
    %394 = vsyncpa [#allocation3], 1
    %395 = vsyncpa [#allocation6], 1
    %396 = vsyncpa [#allocation9], 1
    %397 = vsyncpa [#allocation12], 1
    %398 = vsyncpa [#allocation4], 1

</llo_original>
